<compile_context>
chip_gen: v6e
topology: v6e:2x2x1
jax: 0.10.0
libtpu: 0.0.40
codegen_flags: <defaults>
</compile_context>

<pallas_src>
import jax
import jax.numpy as jnp
from jax.experimental import pallas as pl
from jax.experimental.pallas import tpu as pltpu

TILE_BYTES = 2 * 1024 * 1024   # per-buffer VMEM tile budget (2 MiB)
LANE_CANDIDATES = (1024, 512, 256, 128)


def _zero_kernel(x_ref, o_ref):
    # ZeroHook semantics: y = x * 0 (VPU elementwise; NaN*0 -> NaN preserved).
    o_ref[...] = x_ref[...] * jnp.asarray(0, dtype=x_ref.dtype)


def _round_up(a, b):
    return ((a + b - 1) // b) * b


def _sublane_align(itemsize):
    # Native sublane packing: f32 -> 8, bf16/f16 -> 16, int8/fp8 -> 32.
    return max(8, 32 // max(1, itemsize))


def _pick_lane_width(n, align):
    """Largest lane width (multiple of 128) that minimizes padded elements."""
    best_key, best_w = None, 128
    for w in LANE_CANDIDATES:
        rows = _round_up(-(-n // w), align)
        padded = rows * w
        key = (padded, -w)
        if best_key is None or key < best_key:
            best_key, best_w = key, w
    return best_w


def _pick_tile_rows(rows, lane_w, itemsize, align):
    """Row-tile minimizing (padded HBM bytes / BW + per-step overhead)."""
    max_rows = max(align, (TILE_BYTES // (lane_w * itemsize)) // align * align)
    max_rows = min(max_rows, rows)
    best_key, best_t = None, align
    t = align
    while t <= max_rows:
        padded_rows = _round_up(rows, t)
        steps = padded_rows // t
        # rough model: read+write bytes at ~1.3 TB/s + 0.35 us per grid step
        cost = (padded_rows * lane_w * itemsize * 2) / 1.3e12 + steps * 0.35e-6
        key = (cost, -t)
        if best_key is None or key < best_key:
            best_key, best_t = key, t
        t += align
    return best_t


def zero_hook_forward(x):
    """Equivalent of ZeroHook.forward(x) -> x * 0."""
    orig_shape = x.shape
    orig_dtype = x.dtype

    flat = x.reshape(-1)
    n = flat.shape[0]
    if n == 0:
        return jnp.zeros(orig_shape, orig_dtype)

    itemsize = jnp.dtype(orig_dtype).itemsize
    align = _sublane_align(itemsize)

    lane_w = _pick_lane_width(n, align)
    rows = _round_up(-(-n // lane_w), align)
    tile_r = _pick_tile_rows(rows, lane_w, itemsize, align)
    rows = _round_up(rows, tile_r)        # make the grid exact

    padded_n = rows * lane_w
    if padded_n != n:
        flat = jnp.pad(flat, (0, padded_n - n))
    x2d = flat.reshape(rows, lane_w)

    grid = (rows // tile_r,)
    out2d = pl.pallas_call(
        _zero_kernel,
        out_shape=jax.ShapeDtypeStruct((rows, lane_w), orig_dtype),
        grid=grid,
        in_specs=[pl.BlockSpec((tile_r, lane_w), lambda i: (i, 0))],
        out_specs=pl.BlockSpec((tile_r, lane_w), lambda i: (i, 0)),
        compiler_params=pltpu.CompilerParams(
            dimension_semantics=("parallel",),
        ),
    )(x2d)

    out = out2d.reshape(-1)
    if padded_n != n:
        out = out[:n]
    return out.reshape(orig_shape)


if __name__ == "__main__":
    key = jax.random.PRNGKey(0)
    x = jax.random.normal(key, (2, 4, 16, 16), dtype=jnp.float32)

    y = zero_hook_forward(x)
    jax.block_until_ready(y)

    assert y.shape == x.shape and y.dtype == x.dtype
    assert jnp.allclose(y, x * 0), "ZeroHook forward mismatch (expected x * 0)"

    # Sanity on a ragged / larger shape as well.
    x2 = jax.random.normal(jax.random.PRNGKey(1), (3, 5, 17), dtype=jnp.float32)
    y2 = zero_hook_forward(x2)
    jax.block_until_ready(y2)
    assert y2.shape == x2.shape and jnp.allclose(y2, x2 * 0)

    print("KERNEL_OK")
</pallas_src>

<mosaic_0001>
module attributes {stable_mosaic.version = 11 : i64} {
  func.func @_zero_kernel(%arg0: i32, %arg1: memref<8x256xf32, #tpu.memory_space<vmem>>, %arg2: memref<8x256xf32, #tpu.memory_space<vmem>>) attributes {dimension_semantics = [#tpu.dimension_semantics<parallel>], iteration_bounds = array<i64: 1>, scalar_prefetch = 0 : i64, scratch_operands = 0 : i64, tpu.core_type = #tpu.core_type<tc>, window_params = [{transform_indices = @transform_0, window_bounds = array<i64: 8, 256>}, {transform_indices = @transform_1, window_bounds = array<i64: 8, 256>}]} {
    %c0 = arith.constant 0 : index
    %c0_0 = arith.constant 0 : index
    %0 = vector.load %arg1[%c0, %c0_0] : memref<8x256xf32, #tpu.memory_space<vmem>>, vector<8x256xf32>
    %cst = arith.constant 0.000000e+00 : f32
    %1 = vector.broadcast %cst : f32 to vector<8x256xf32>
    %2 = arith.mulf %0, %1 : vector<8x256xf32>
    %c0_1 = arith.constant 0 : index
    %c0_2 = arith.constant 0 : index
    %3 = vector.load %arg2[%c0_1, %c0_2] : memref<8x256xf32, #tpu.memory_space<vmem>>, vector<8x256xf32>
    tpu.vector_store %arg2[%c0_1, %c0_2], %2 {strides = array<i32>} : memref<8x256xf32, #tpu.memory_space<vmem>>, vector<8x256xf32>,
    return
  }
  func.func @transform_0(%arg0: i32) -> (i32, i32) {
    %c0_i32 = arith.constant 0 : i32
    %c0_i32_0 = arith.constant 0 : i32
    return %arg0, %c0_i32 : i32, i32
  }
  func.func @transform_1(%arg0: i32) -> (i32, i32) {
    %c0_i32 = arith.constant 0 : i32
    %c0_i32_0 = arith.constant 0 : i32
    return %arg0, %c0_i32 : i32, i32
  }
}

</mosaic_0001>

<llo_original>
// kernel: tpu_custom_call.1
$region0: #{tpu_custom_call.1}
  #allocation0 [shape = 'u32[]', space=smem, size = 0x4, offset = 0x4, fixed_abs, tag = 'smem constant byte address 0x4 - core index']
  #allocation1 [shape = 'u32[144,128]{1,0:T(1,128)}', space=vmem, size = 0x12000, scoped, tag = 'internal scratch']
  %s0 = inlined_call_operand.hbm [shape: f32[8,256], index: 0, kind: input, shape index: {}]
  %s1 = inlined_call_operand.hbm [shape: f32[8,256], index: 1, kind: output, shape index: {}]
  %s2 = sld [smem:[#allocation0]]
  $region18: #{tpu_custom_call.1} parent=0
    _
  %s4 = ssub.s32 1, %s2
  %s5 = scalar_select 0, %s4, %s2
  $region1: #{tpu_custom_call.1} parent=0
    #allocation2 [shape = 'u8[8192]{0}', space=vmem, size = 0x2000, scoped, tag = 'input window, operand 0, single buffered']
    #allocation3 [shape = 's32[1]{0}', space=sflag, size = 0x4, scoped, tag = 'scoped memory for tpu_custom_call.1']
    #allocation4 [shape = 's32[1]{0}', space=sflag, size = 0x4, scoped, tag = 'scoped memory for tpu_custom_call.1']
    #allocation5 [shape = 'u8[8192]{0}', space=vmem, size = 0x2000, scoped, tag = 'output window, operand 0, single buffered']
    %6 = vsyncpa [#allocation3], 0
    %7 = vsyncpa [#allocation4], 0
    // Predicated region
    $region2: #{tpu_custom_call.1} parent=1 // pred_check
      _
    $region3: #{tpu_custom_call.1} parent=1 // pred_check_branch
      %9 = sbr.rel (0) target = $region5
    $region4: #{tpu_custom_call.1} parent=1 // pred_region
      %s11 = ssub.s32 256, 256
      %12 = vsyncadd [#allocation3], %s11
      %s14 = sshll.u32 [#allocation2], 4
      %s15 = int_to_ptr.vmem [resolvable:$true] %s14
      %17 = dma.hbm_to_vmem [thread:$0]  %s0, 256, %s15, [#allocation3]
    $region5: #{tpu_custom_call.1} parent=1 // pred_fallthru
      _
    // Predicated region
    $region6: #{tpu_custom_call.1} parent=1 // pred_check
      _
    $region7: #{tpu_custom_call.1} parent=1 // pred_check_branch
      %19 = sbr.rel (0) target = $region9
    $region8: #{tpu_custom_call.1} parent=1 // pred_region
      %20 = dma.done [#allocation3], 256
    $region9: #{tpu_custom_call.1} parent=1 // pred_fallthru
      _
    %v21 = vld [vmem:[#allocation2] sm:$0xff]
    %v22 = vld [vmem:[#allocation2 + $0x8] sm:$0xff]
    %v23 = vmul.f32 %v21, 0.0
    %v24 = vmul.f32 %v22, 0.0
    %25 = vst [vmem:[#allocation5] sm:$0xff] %v23
    %26 = vst [vmem:[#allocation5 + $0x8] sm:$0xff] %v24
    // Predicated region
    $region10: #{tpu_custom_call.1} parent=1 // pred_check
      _
    $region11: #{tpu_custom_call.1} parent=1 // pred_check_branch
      %28 = sbr.rel (0) target = $region13
    $region12: #{tpu_custom_call.1} parent=1 // pred_region
      %s30 = ssub.s32 256, 256
      %31 = vsyncadd [#allocation4], %s30
      %s33 = sshll.u32 [#allocation5], 4
      %s34 = int_to_ptr.vmem [resolvable:$true] %s33
      %36 = dma.vmem_to_hbm [thread:$0]  %s34, 256, %s1, [#allocation4]
    $region13: #{tpu_custom_call.1} parent=1 // pred_fallthru
      _
    // Predicated region
    $region14: #{tpu_custom_call.1} parent=1 // pred_check
      _
    $region15: #{tpu_custom_call.1} parent=1 // pred_check_branch
      %38 = sbr.rel (0) target = $region17
    $region16: #{tpu_custom_call.1} parent=1 // pred_region
      %39 = dma.done [#allocation4], 256
    $region17: #{tpu_custom_call.1} parent=1 // pred_fallthru
      _
    %40 = vsyncpa [#allocation3], 1
    %41 = vsyncpa [#allocation4], 1

</llo_original>
